<compile_context>
chip_gen: v6e
topology: v6e:2x2x1
jax: 0.10.0
libtpu: 0.0.40
codegen_flags: <defaults>
</compile_context>

<pallas_src>
import functools

import numpy as np
import jax
import jax.numpy as jnp
from jax.experimental import pallas as pl
from jax.experimental.pallas import tpu as pltpu


def _round_up(x: int, m: int) -> int:
    return ((x + m - 1) // m) * m


def _cdiv(a: int, b: int) -> int:
    return -(-a // b)


def _gen_net_kernel(x_ref, at_ref, o_ref):
    # Canonical (tm, K) @ (K, N) MXU matmul with f32 accumulation.  A was
    # pre-transposed in the (jitted, fused) wrapper, so no transpose on the hot path.
    o_ref[...] = jnp.dot(
        x_ref[...], at_ref[...], preferred_element_type=jnp.float32
    ).astype(o_ref.dtype)


@functools.partial(jax.jit, static_argnames=("use_bf16", "max_tm"))
def generative_net_forward(
    components: jax.Array,
    A: jax.Array,
    *,
    use_bf16: bool = False,
    max_tm: int = 4096,
) -> jax.Array:
    """Pallas equivalent of Generative_net.forward: torch.mm(components, A.t())."""
    batch, num_components = components.shape
    num_mixtures, num_components_a = A.shape
    assert num_components == num_components_a
    out_dtype = components.dtype

    # Sublane granule: bf16 packs 16 rows per vreg, f32 packs 8.
    sub = 16 if use_bf16 else 8

    # Pre-transpose the tiny weight once (fuses under jit) -> (K, N).
    a_t = A.T
    x = components
    if use_bf16:
        x = x.astype(jnp.bfloat16)
        a_t = a_t.astype(jnp.bfloat16)

    # Adaptive batch tiling: pad only to the sublane granule; for large batches pick
    # an even step count (v7x megacore balance) and a tm that divides the padded batch.
    b_pad = _round_up(batch, sub)
    if b_pad <= max_tm:
        tm = b_pad
        n_steps = 1
    else:
        n_steps = _cdiv(b_pad, max_tm)
        if n_steps % 2:
            n_steps += 1  # even number of steps: balanced across v7x's 2 TensorCores
        tm = _round_up(_cdiv(b_pad, n_steps), sub)
        b_pad = tm * n_steps  # pad waste is at most ~n_steps * sub rows

    if b_pad != batch:
        x = jnp.pad(x, ((0, b_pad - batch), (0, 0)))

    in_itemsize = jnp.dtype(x.dtype).itemsize
    out_itemsize = jnp.dtype(out_dtype).itemsize
    cost = pl.CostEstimate(
        flops=2 * b_pad * num_components * num_mixtures,
        transcendentals=0,
        bytes_accessed=(
            b_pad * num_components * in_itemsize
            + num_components * num_mixtures * in_itemsize
            + b_pad * num_mixtures * out_itemsize
        ),
    )

    if n_steps == 1:
        # Single tile: whole operands resident in VMEM, no grid / pipeline scaffolding.
        out = pl.pallas_call(
            _gen_net_kernel,
            out_shape=jax.ShapeDtypeStruct((b_pad, num_mixtures), out_dtype),
            cost_estimate=cost,
        )(x, a_t)
    else:
        # Batch-tiled path: grid over batch, marked "parallel" so v7x shards it across
        # both TensorCores.  The tiny weight block is re-used every step.
        out = pl.pallas_call(
            _gen_net_kernel,
            out_shape=jax.ShapeDtypeStruct((b_pad, num_mixtures), out_dtype),
            grid=(n_steps,),
            in_specs=[
                pl.BlockSpec((tm, num_components), lambda i: (i, 0)),
                pl.BlockSpec((num_components, num_mixtures), lambda i: (0, 0)),
            ],
            out_specs=pl.BlockSpec((tm, num_mixtures), lambda i: (i, 0)),
            compiler_params=pltpu.CompilerParams(
                dimension_semantics=("parallel",)
            ),
            cost_estimate=cost,
        )(x, a_t)

    # Strip batch padding (fuses with the surrounding jit; no extra HBM pass).
    return out[:batch, :]


def init_A(key, num_mixtures, num_components, A_base):
    # Mirrors: nn.Parameter(A + uniform(-0.2, 0.2, [num_mixtures, num_components]))
    noise = jax.random.uniform(
        key, (num_mixtures, num_components), minval=-0.2, maxval=0.2, dtype=jnp.float32
    )
    return A_base + noise


if __name__ == "__main__":
    key = jax.random.PRNGKey(0)
    k_A_base, k_noise, k_x, k_x_big = jax.random.split(key, 4)

    # Small shapes consistent with the module's forward.
    batch = 8
    num_components = 32
    num_mixtures = 16

    A_base = jax.random.normal(k_A_base, (num_mixtures, num_components), dtype=jnp.float32)
    A = init_A(k_noise, num_mixtures, num_components, A_base)
    components = jax.random.normal(k_x, (batch, num_components), dtype=jnp.float32)

    # 1) Single-tile (no-grid) path, f32 operands.
    result = jax.block_until_ready(generative_net_forward(components, A))
    ref = components @ A.T
    np.testing.assert_allclose(np.asarray(result), np.asarray(ref), rtol=1e-5, atol=1e-5)

    # 2) Non-multiple-of-tile batch exercises the adaptive batch-tiled, even-step,
    #    megacore-parallel grid path (max_tm lowered to force the grid at small sizes).
    big_batch = 1000
    components_big = jax.random.normal(
        k_x_big, (big_batch, num_components), dtype=jnp.float32
    )
    result_big = jax.block_until_ready(
        generative_net_forward(components_big, A, max_tm=256)
    )
    ref_big = components_big @ A.T
    np.testing.assert_allclose(
        np.asarray(result_big), np.asarray(ref_big), rtol=1e-5, atol=1e-5
    )

    # 3) Optional bf16-operand path (f32 accumulation, 16-row sublane pad) — looser tol.
    result_bf16 = jax.block_until_ready(
        generative_net_forward(components, A, use_bf16=True)
    )
    np.testing.assert_allclose(
        np.asarray(result_bf16), np.asarray(ref), rtol=5e-2, atol=5e-1
    )

    print("KERNEL_OK")
</pallas_src>

<mosaic_0001>
module attributes {stable_mosaic.version = 11 : i64} {
  func.func @_gen_net_kernel(%arg0: memref<8x32xf32, #tpu.memory_space<vmem>>, %arg1: memref<32x16xf32, #tpu.memory_space<vmem>>, %arg2: memref<8x16xf32, #tpu.memory_space<vmem>>) attributes {dimension_semantics = [], scalar_prefetch = 0 : i64, scratch_operands = 0 : i64, tpu.core_type = #tpu.core_type<tc>} {
    %c0 = arith.constant 0 : index
    %c0_0 = arith.constant 0 : index
    %0 = vector.load %arg0[%c0, %c0_0] : memref<8x32xf32, #tpu.memory_space<vmem>>, vector<8x32xf32>
    %c0_1 = arith.constant 0 : index
    %c0_2 = arith.constant 0 : index
    %1 = vector.load %arg1[%c0_1, %c0_2] : memref<32x16xf32, #tpu.memory_space<vmem>>, vector<32x16xf32>
    %cst = arith.constant dense<0.000000e+00> : vector<8x16xf32>
    %2 = tpu.matmul %0, %1, %cst {dimension_numbers = #tpu.dot_dimension_numbers<[1], [0], [0], [1], [0, 0, 1, 1], [], []>} : vector<8x32xf32>, vector<32x16xf32>, vector<8x16xf32> -> vector<8x16xf32>
    %c0_3 = arith.constant 0 : index
    %c0_4 = arith.constant 0 : index
    %3 = vector.load %arg2[%c0_3, %c0_4] : memref<8x16xf32, #tpu.memory_space<vmem>>, vector<8x16xf32>
    tpu.vector_store %arg2[%c0_3, %c0_4], %2 {strides = array<i32>} : memref<8x16xf32, #tpu.memory_space<vmem>>, vector<8x16xf32>,
    return
  }
}

</mosaic_0001>

<llo_original>
// kernel: generative_net_forward.1
$region0: #{generative_net_forward.1}
  #allocation0 [shape = 'u32[]', space=smem, size = 0x4, offset = 0x4, fixed_abs, tag = 'smem constant byte address 0x4 - core index']
  #allocation1 [shape = 'u32[144,128]{1,0:T(1,128)}', space=vmem, size = 0x12000, scoped, tag = 'internal scratch']
  %s0 = inlined_call_operand.vmem [shape: f32[8,32], index: 0, kind: input, shape index: {}]
  %s1 = inlined_call_operand.vmem [shape: f32[32,16], index: 1, kind: input, shape index: {}]
  %s2 = inlined_call_operand.hbm [shape: f32[8,16], index: 2, kind: output, shape index: {}]
  %s3 = sld [smem:[#allocation0]]
  $region18: #{generative_net_forward.1} parent=0
    _
  %s5 = ssub.s32 1, %s3
  %s6 = scalar_select 0, %s5, %s3
  $region1: #{generative_net_forward.1} parent=0
    #allocation2 [shape = 'u8[4096]{0}', space=vmem, size = 0x1000, scoped, tag = 'output window, operand 0, single buffered']
    #allocation3 [shape = 's32[1]{0}', space=sflag, size = 0x4, scoped, tag = 'scoped memory for generative_net_forward.1']
    %7 = vsyncpa [#allocation3], 0
    // Predicated region
    $region2: #{generative_net_forward.1} parent=1 // pred_check
      _
    $region3: #{generative_net_forward.1} parent=1 // pred_check_branch
      %9 = sbr.rel (0) target = $region5
    $region4: #{generative_net_forward.1} parent=1 // pred_region
      _
    $region5: #{generative_net_forward.1} parent=1 // pred_fallthru
      _
    // Predicated region
    $region6: #{generative_net_forward.1} parent=1 // pred_check
      _
    $region7: #{generative_net_forward.1} parent=1 // pred_check_branch
      %11 = sbr.rel (0) target = $region9
    $region8: #{generative_net_forward.1} parent=1 // pred_region
      _
    $region9: #{generative_net_forward.1} parent=1 // pred_fallthru
      _
    %v12 = vld [vmem:[%s0] sm:$0xff]
    %v13 = vld [vmem:[%s1] sm:$0xff]
    %v14 = vld [vmem:[%s1 + $0x8] sm:$0xff]
    %v15 = vld [vmem:[%s1 + $0x10] sm:$0xff]
    %v16 = vld [vmem:[%s1 + $0x18] sm:$0xff]
    %vm17 = vcmask 261120
    %v19 = vsel %vm17, %v12, 0
    %21 = vmatprep.subr.mxu0 0.0
    %22 = vmatpush1.msra.mxu0 0.0
    %23 = vmatprep.subr.mxu0 0.0
    %24 = vmatpush1.msra.mxu0 0.0
    %25 = vmatprep.subr.mxu0 0.0
    %26 = vmatpush1.msra.mxu0 0.0
    %27 = vmatprep.subr.mxu0 0.0
    %28 = vmatpush1.msra.mxu0 0.0
    %29 = vmatprep.subr.mxu0 0.0
    %30 = vmatpush1.msra.mxu0 0.0
    %31 = vmatprep.subr.mxu0 0.0
    %32 = vmatpush1.msra.mxu0 0.0
    %33 = vmatprep.subr.mxu0 0.0
    %34 = vmatpush1.msra.mxu0 0.0
    %35 = vmatprep.subr.mxu0 0.0
    %36 = vmatpush1.msra.mxu0 0.0
    %37 = vmatprep.subr.mxu0 0.0
    %38 = vmatpush1.msra.mxu0 0.0
    %39 = vmatprep.subr.mxu0 0.0
    %40 = vmatpush1.msra.mxu0 0.0
    %41 = vmatprep.subr.mxu0 0.0
    %42 = vmatpush1.msra.mxu0 0.0
    %43 = vmatprep.subr.mxu0 0.0
    %44 = vmatpush1.msra.mxu0 0.0
    %45 = vmatprep.subr.mxu0 0.0
    %46 = vmatpush1.msra.mxu0 %v16
    %47 = vmatprep.subr.mxu0 0.0
    %48 = vmatpush1.msra.mxu0 %v15
    %49 = vmatprep.subr.mxu0 0.0
    %50 = vmatpush1.msra.mxu0 %v14
    %51 = vmatprep.subr.mxu0 0.0
    %52 = vmatpush1.msra.mxu0 %v13
    %53 = vmatprep.subr.mxu0 0.0
    %54 = vmatpush2.msra.mxu0 0.0
    %55 = vmatprep.subr.mxu0 0.0
    %56 = vmatpush2.msra.mxu0 0.0
    %57 = vmatprep.subr.mxu0 0.0
    %58 = vmatpush2.msra.mxu0 0.0
    %59 = vmatprep.subr.mxu0 0.0
    %60 = vmatpush2.msra.mxu0 0.0
    %61 = vmatprep.subr.mxu0 0.0
    %62 = vmatpush2.msra.mxu0 0.0
    %63 = vmatprep.subr.mxu0 0.0
    %64 = vmatpush2.msra.mxu0 0.0
    %65 = vmatprep.subr.mxu0 0.0
    %66 = vmatpush2.msra.mxu0 0.0
    %67 = vmatprep.subr.mxu0 0.0
    %68 = vmatpush2.msra.mxu0 0.0
    %69 = vmatprep.subr.mxu0 0.0
    %70 = vmatpush2.msra.mxu0 0.0
    %71 = vmatprep.subr.mxu0 0.0
    %72 = vmatpush2.msra.mxu0 0.0
    %73 = vmatprep.subr.mxu0 0.0
    %74 = vmatpush2.msra.mxu0 0.0
    %75 = vmatprep.subr.mxu0 0.0
    %76 = vmatpush2.msra.mxu0 0.0
    %77 = vmatprep.subr.mxu0 0.0
    %78 = vmatpush2.msra.mxu0 0.0
    %79 = vmatprep.subr.mxu0 0.0
    %80 = vmatpush2.msra.mxu0 0.0
    %81 = vmatprep.subr.mxu0 0.0
    %82 = vmatpush2.msra.mxu0 0.0
    %83 = vmatprep.subr.mxu0 0.0
    %84 = vmatpush2.msra.mxu0 0.0
    %85 = vmatprep.mubr.f32.mxu0 0.0
    %86 = vmatmul.mubr.f32.gmra.mxu0 %v19
    %v87 = vpop.f32.mrf.mxu0
    %v88 = vadd.f32 0.0, %v87
    %v89 = vpop.f32.mrf.mxu0
    %90 = vdwg.mxu0
    %vm91 = vcmask 130048
    %92 = vst.msk [vmem:[#allocation2] sm:$0xff] %vm91, %v88
    // Predicated region
    $region10: #{generative_net_forward.1} parent=1 // pred_check
      _
    $region11: #{generative_net_forward.1} parent=1 // pred_check_branch
      %94 = sbr.rel (0) target = $region13
    $region12: #{generative_net_forward.1} parent=1 // pred_region
      %s96 = ssub.s32 128, 128
      %97 = vsyncadd [#allocation3], %s96
      %s99 = sshll.u32 [#allocation2], 4
      %s100 = int_to_ptr.vmem [resolvable:$true] %s99
      %102 = dma.vmem_to_hbm [thread:$0]  %s100, 128, %s2, [#allocation3]
    $region13: #{generative_net_forward.1} parent=1 // pred_fallthru
      _
    // Predicated region
    $region14: #{generative_net_forward.1} parent=1 // pred_check
      _
    $region15: #{generative_net_forward.1} parent=1 // pred_check_branch
      %104 = sbr.rel (0) target = $region17
    $region16: #{generative_net_forward.1} parent=1 // pred_region
      %105 = dma.done [#allocation3], 128
    $region17: #{generative_net_forward.1} parent=1 // pred_fallthru
      _
    %106 = vsyncpa [#allocation3], 1

</llo_original>
